<compile_context>
chip_gen: v6e
topology: v6e:2x2x1
jax: 0.10.0
libtpu: 0.0.40
codegen_flags: <defaults>
</compile_context>

<pallas_src>
import functools

import jax
import jax.numpy as jnp
from jax.experimental import pallas as pl
from jax.experimental.pallas import tpu as pltpu


def _twin_conv_kernel(x_ref, w_ref, b_ref, ml_ref, mr_ref, o_ref, *, H, W, Cin):
    # x_ref : (1, Cin, P)     f32  flat-padded input, P = H*W + 2*(W+1)
    # w_ref : (Cout, 9*Cin)   f32  blended weight, tap-major (kh, kw, cin)
    # b_ref : (Cout, 1)       f32  blended bias
    # ml_ref: (1, M)          f32  valid mask for dx = -1 taps (w >= 1)
    # mr_ref: (1, M)          f32  valid mask for dx = +1 taps (w <= W-2)
    # o_ref : (1, Cout, M)    f32  lane-dense output (M = H*W)
    M = H * W
    x = x_ref[0]                      # (Cin, P)
    mask_l = ml_ref[...]              # (1, M)
    mask_r = mr_ref[...]              # (1, M)

    taps = []
    for dy in (-1, 0, 1):
        for dx in (-1, 0, 1):
            off = (W + 1) + dy * W + dx          # static, in [0, 2W+2]
            t = x[:, off:off + M]                # (Cin, M) static lane slice
            if dx == -1:
                t = t * mask_l
            elif dx == 1:
                t = t * mask_r
            taps.append(t)
    patches = jnp.concatenate(taps, axis=0)      # (9*Cin, M), built in VMEM

    acc = jnp.dot(w_ref[...], patches, preferred_element_type=jnp.float32)
    o_ref[0] = acc + b_ref[...]                  # (Cout, M) unmasked stores


def twin_conv(x_nchw, w_pre, b_pre, w_cur, b_cur, r):
    """TwinConv forward: conv_pre(x)*(1-r) + conv_cur(x)*r  (3x3, pad=1, stride=1).

    x_nchw : (N, Cin, H, W) float32
    w_*    : (Cout, Cin, 3, 3) float32   (PyTorch Conv2d weight layout)
    b_*    : (Cout,) float32
    r      : scalar blend ratio
    returns: (N, Cout, H, W) float32
    """
    n, cin, h, w = x_nchw.shape
    cout = w_pre.shape[0]
    m = h * w
    k = 9 * cin
    pad = w + 1
    p = m + 2 * pad

    # --- algebraic fusion: blend weights/bias once (tiny elementwise op) ---
    r = jnp.asarray(r, dtype=jnp.float32)
    w_blend = (1.0 - r) * w_pre.astype(jnp.float32) + r * w_cur.astype(jnp.float32)
    b_blend = (1.0 - r) * b_pre.astype(jnp.float32) + r * b_cur.astype(jnp.float32)

    # (Cout, Cin, 3, 3) -> (Cout, 9*Cin) in (kh, kw, cin) tap-major order.
    wm = jnp.transpose(w_blend, (0, 2, 3, 1)).reshape(cout, k)
    bm = b_blend.reshape(cout, 1)

    # Flat-padded input: zeros handle the dy=+-1 vertical halo; masks handle dx.
    x_flat = jnp.pad(x_nchw.reshape(n, cin, m).astype(jnp.float32),
                     ((0, 0), (0, 0), (pad, pad)))

    # Column-validity masks for the horizontal taps (shape-only constants).
    col = jnp.arange(m, dtype=jnp.int32) % w
    mask_l = (col >= 1).astype(jnp.float32).reshape(1, m)
    mask_r = (col <= w - 2).astype(jnp.float32).reshape(1, m)

    kernel = functools.partial(_twin_conv_kernel, H=h, W=w, Cin=cin)

    cost = pl.CostEstimate(
        flops=int(2 * n * m * k * cout),
        transcendentals=0,
        bytes_accessed=int(n * cin * p * 4 + cout * k * 4 + cout * 4
                           + 2 * m * 4 + n * cout * m * 4),
    )

    out = pl.pallas_call(
        kernel,
        out_shape=jax.ShapeDtypeStruct((n, cout, m), jnp.float32),
        grid=(n,),
        in_specs=[
            pl.BlockSpec((1, cin, p), lambda i: (i, 0, 0)),    # per-sample input
            pl.BlockSpec((cout, k), lambda i: (0, 0)),         # blended weight (resident)
            pl.BlockSpec((cout, 1), lambda i: (0, 0)),         # blended bias (resident)
            pl.BlockSpec((1, m), lambda i: (0, 0)),            # dx=-1 mask (resident)
            pl.BlockSpec((1, m), lambda i: (0, 0)),            # dx=+1 mask (resident)
        ],
        out_specs=pl.BlockSpec((1, cout, m), lambda i: (i, 0, 0)),
        compiler_params=pltpu.CompilerParams(
            dimension_semantics=("parallel",),
        ),
        cost_estimate=cost,
    )(x_flat, wm, bm, mask_l, mask_r)

    # (N, Cout, H*W) -> (N, Cout, H, W): trailing dim split only, no transpose.
    return out.reshape(n, cout, h, w)


def _reference(x_nchw, w_pre, b_pre, w_cur, b_cur, r):
    """Pure-JAX f32 reference using lax convolution (NCHW, 3x3, pad=1)."""
    dn = jax.lax.conv_dimension_numbers(x_nchw.shape, w_pre.shape,
                                        ("NCHW", "OIHW", "NCHW"))

    def conv(wt, bt):
        y = jax.lax.conv_general_dilated(x_nchw, wt, (1, 1), "SAME",
                                         dimension_numbers=dn)
        return y + bt.reshape(1, -1, 1, 1)

    x1 = conv(w_pre, b_pre)
    x2 = conv(w_cur, b_cur)
    return x1 * (1.0 - r) + x2 * r


if __name__ == "__main__":
    key = jax.random.PRNGKey(0)
    k1, k2, k3, k4, k5 = jax.random.split(key, 5)

    N, Cin, H, W = 2, 4, 16, 16
    Cout = 32
    r = 0.25

    x = jax.random.normal(k1, (N, Cin, H, W), dtype=jnp.float32)
    w_pre = 0.1 * jax.random.normal(k2, (Cout, Cin, 3, 3), dtype=jnp.float32)
    b_pre = 0.1 * jax.random.normal(k3, (Cout,), dtype=jnp.float32)
    w_cur = 0.1 * jax.random.normal(k4, (Cout, Cin, 3, 3), dtype=jnp.float32)
    b_cur = 0.1 * jax.random.normal(k5, (Cout,), dtype=jnp.float32)

    fn = jax.jit(twin_conv)
    out = jax.block_until_ready(fn(x, w_pre, b_pre, w_cur, b_cur, r))

    ref = _reference(x, w_pre, b_pre, w_cur, b_cur, r)
    assert out.shape == (N, Cout, H, W)
    # Full f32 path (f32 taps, f32 blended weight, f32 MXU accumulation).
    assert jnp.allclose(out, ref, atol=1e-3, rtol=1e-3), "mismatch vs reference"

    print("KERNEL_OK")
</pallas_src>

<mosaic_0001>
module attributes {stable_mosaic.version = 11 : i64} {
  func.func @_twin_conv_kernel(%arg0: i32, %arg1: memref<1x4x290xf32, #tpu.memory_space<vmem>>, %arg2: memref<32x36xf32, #tpu.memory_space<vmem>>, %arg3: memref<32x1xf32, #tpu.memory_space<vmem>>, %arg4: memref<1x256xf32, #tpu.memory_space<vmem>>, %arg5: memref<1x256xf32, #tpu.memory_space<vmem>>, %arg6: memref<1x32x256xf32, #tpu.memory_space<vmem>>) attributes {dimension_semantics = [#tpu.dimension_semantics<parallel>], iteration_bounds = array<i64: 2>, scalar_prefetch = 0 : i64, scratch_operands = 0 : i64, tpu.core_type = #tpu.core_type<tc>, window_params = [{transform_indices = @transform_0, window_bounds = array<i64: 1, 4, 290>}, {pipeline_mode = #tpu.pipeline_mode<synchronous>, transform_indices = @transform_1, window_bounds = array<i64: 32, 36>}, {pipeline_mode = #tpu.pipeline_mode<synchronous>, transform_indices = @transform_2, window_bounds = array<i64: 32, 1>}, {pipeline_mode = #tpu.pipeline_mode<synchronous>, transform_indices = @transform_3, window_bounds = array<i64: 1, 256>}, {pipeline_mode = #tpu.pipeline_mode<synchronous>, transform_indices = @transform_4, window_bounds = array<i64: 1, 256>}, {transform_indices = @transform_5, window_bounds = array<i64: 1, 32, 256>}]} {
    %c0 = arith.constant 0 : index
    %c0_0 = arith.constant 0 : index
    %c0_1 = arith.constant 0 : index
    %0 = vector.load %arg1[%c0, %c0_0, %c0_1] : memref<1x4x290xf32, #tpu.memory_space<vmem>>, vector<1x4x290xf32>
    %1 = vector.shape_cast %0 : vector<1x4x290xf32> to vector<4x290xf32>
    %c0_2 = arith.constant 0 : index
    %c0_3 = arith.constant 0 : index
    %2 = vector.load %arg4[%c0_2, %c0_3] : memref<1x256xf32, #tpu.memory_space<vmem>>, vector<1x256xf32>
    %c0_4 = arith.constant 0 : index
    %c0_5 = arith.constant 0 : index
    %3 = vector.load %arg5[%c0_4, %c0_5] : memref<1x256xf32, #tpu.memory_space<vmem>>, vector<1x256xf32>
    %4 = vector.extract_strided_slice %1 {offsets = [0, 0], sizes = [4, 256], strides = [1, 1]} : vector<4x290xf32> to vector<4x256xf32>
    %5 = vector.broadcast %2 : vector<1x256xf32> to vector<4x256xf32>
    %6 = arith.mulf %4, %5 : vector<4x256xf32>
    %7 = vector.extract_strided_slice %1 {offsets = [0, 1], sizes = [4, 256], strides = [1, 1]} : vector<4x290xf32> to vector<4x256xf32>
    %8 = vector.extract_strided_slice %1 {offsets = [0, 2], sizes = [4, 256], strides = [1, 1]} : vector<4x290xf32> to vector<4x256xf32>
    %9 = vector.broadcast %3 : vector<1x256xf32> to vector<4x256xf32>
    %10 = arith.mulf %8, %9 : vector<4x256xf32>
    %11 = vector.extract_strided_slice %1 {offsets = [0, 16], sizes = [4, 256], strides = [1, 1]} : vector<4x290xf32> to vector<4x256xf32>
    %12 = vector.broadcast %2 : vector<1x256xf32> to vector<4x256xf32>
    %13 = arith.mulf %11, %12 : vector<4x256xf32>
    %14 = vector.extract_strided_slice %1 {offsets = [0, 17], sizes = [4, 256], strides = [1, 1]} : vector<4x290xf32> to vector<4x256xf32>
    %15 = vector.extract_strided_slice %1 {offsets = [0, 18], sizes = [4, 256], strides = [1, 1]} : vector<4x290xf32> to vector<4x256xf32>
    %16 = vector.broadcast %3 : vector<1x256xf32> to vector<4x256xf32>
    %17 = arith.mulf %15, %16 : vector<4x256xf32>
    %18 = vector.extract_strided_slice %1 {offsets = [0, 32], sizes = [4, 256], strides = [1, 1]} : vector<4x290xf32> to vector<4x256xf32>
    %19 = vector.broadcast %2 : vector<1x256xf32> to vector<4x256xf32>
    %20 = arith.mulf %18, %19 : vector<4x256xf32>
    %21 = vector.extract_strided_slice %1 {offsets = [0, 33], sizes = [4, 256], strides = [1, 1]} : vector<4x290xf32> to vector<4x256xf32>
    %22 = vector.extract_strided_slice %1 {offsets = [0, 34], sizes = [4, 256], strides = [1, 1]} : vector<4x290xf32> to vector<4x256xf32>
    %23 = vector.broadcast %3 : vector<1x256xf32> to vector<4x256xf32>
    %24 = arith.mulf %22, %23 : vector<4x256xf32>
    %25 = tpu.concatenate %6, %7, %10, %13, %14, %17, %20, %21, %24 in 0 : vector<4x256xf32>, vector<4x256xf32>, vector<4x256xf32>, vector<4x256xf32>, vector<4x256xf32>, vector<4x256xf32>, vector<4x256xf32>, vector<4x256xf32>, vector<4x256xf32> -> vector<36x256xf32>
    %c0_6 = arith.constant 0 : index
    %c0_7 = arith.constant 0 : index
    %26 = vector.load %arg2[%c0_6, %c0_7] : memref<32x36xf32, #tpu.memory_space<vmem>>, vector<32x36xf32>
    %cst = arith.constant dense<0.000000e+00> : vector<32x256xf32>
    %27 = tpu.matmul %26, %25, %cst {dimension_numbers = #tpu.dot_dimension_numbers<[1], [0], [0], [1], [0, 0, 1, 1], [], []>} : vector<32x36xf32>, vector<36x256xf32>, vector<32x256xf32> -> vector<32x256xf32>
    %c0_8 = arith.constant 0 : index
    %c0_9 = arith.constant 0 : index
    %28 = vector.load %arg3[%c0_8, %c0_9] : memref<32x1xf32, #tpu.memory_space<vmem>>, vector<32x1xf32>
    %29 = vector.broadcast %28 : vector<32x1xf32> to vector<32x256xf32>
    %30 = arith.addf %27, %29 : vector<32x256xf32>
    %c0_10 = arith.constant 0 : index
    %c0_11 = arith.constant 0 : index
    %c0_12 = arith.constant 0 : index
    %31 = vector.load %arg6[%c0_10, %c0_11, %c0_12] : memref<1x32x256xf32, #tpu.memory_space<vmem>>, vector<1x32x256xf32>
    %32 = vector.shape_cast %31 : vector<1x32x256xf32> to vector<32x256xf32>
    %33 = vector.shape_cast %30 : vector<32x256xf32> to vector<1x32x256xf32>
    tpu.vector_store %arg6[%c0_10, %c0_11, %c0_12], %33 {strides = array<i32>} : memref<1x32x256xf32, #tpu.memory_space<vmem>>, vector<1x32x256xf32>,
    return
  }
  func.func @transform_0(%arg0: i32) -> (i32, i32, i32) {
    %c0_i32 = arith.constant 0 : i32
    %c0_i32_0 = arith.constant 0 : i32
    %c0_i32_1 = arith.constant 0 : i32
    return %arg0, %c0_i32, %c0_i32_0 : i32, i32, i32
  }
  func.func @transform_1(%arg0: i32) -> (i32, i32) {
    %c0_i32 = arith.constant 0 : i32
    %c0_i32_0 = arith.constant 0 : i32
    %c0_i32_1 = arith.constant 0 : i32
    return %c0_i32, %c0_i32_0 : i32, i32
  }
  func.func @transform_2(%arg0: i32) -> (i32, i32) {
    %c0_i32 = arith.constant 0 : i32
    %c0_i32_0 = arith.constant 0 : i32
    %c0_i32_1 = arith.constant 0 : i32
    return %c0_i32, %c0_i32_0 : i32, i32
  }
  func.func @transform_3(%arg0: i32) -> (i32, i32) {
    %c0_i32 = arith.constant 0 : i32
    %c0_i32_0 = arith.constant 0 : i32
    %c0_i32_1 = arith.constant 0 : i32
    return %c0_i32, %c0_i32_0 : i32, i32
  }
  func.func @transform_4(%arg0: i32) -> (i32, i32) {
    %c0_i32 = arith.constant 0 : i32
    %c0_i32_0 = arith.constant 0 : i32
    %c0_i32_1 = arith.constant 0 : i32
    return %c0_i32, %c0_i32_0 : i32, i32
  }
  func.func @transform_5(%arg0: i32) -> (i32, i32, i32) {
    %c0_i32 = arith.constant 0 : i32
    %c0_i32_0 = arith.constant 0 : i32
    %c0_i32_1 = arith.constant 0 : i32
    return %arg0, %c0_i32, %c0_i32_0 : i32, i32, i32
  }
}

</mosaic_0001>

<llo_original>
// kernel: twin_conv.1
$region0: #{twin_conv.1}
  #allocation0 [shape = 'u32[]', space=smem, size = 0x4, offset = 0x4, fixed_abs, tag = 'smem constant byte address 0x4 - core index']
  #allocation1 [shape = 'u32[144,128]{1,0:T(1,128)}', space=vmem, size = 0x12000, scoped, tag = 'internal scratch']
  %s0 = inlined_call_operand.vmem [shape: f32[2,4,290], index: 0, kind: input, shape index: {}]
  %s1 = inlined_call_operand.vmem [shape: f32[32,36], index: 1, kind: input, shape index: {}]
  %s2 = inlined_call_operand.vmem [shape: f32[32,1], index: 2, kind: input, shape index: {}]
  %s3 = inlined_call_operand.vmem [shape: f32[1,256], index: 3, kind: input, shape index: {}]
  %s4 = inlined_call_operand.vmem [shape: f32[1,256], index: 4, kind: input, shape index: {}]
  %s5 = inlined_call_operand.vmem [shape: f32[2,32,256], index: 5, kind: output, shape index: {}]
  %s6 = sld [smem:[#allocation0]]
  $region53: #{twin_conv.1} parent=0
    _
  %s8 = ssub.s32 1, %s6
  %s9 = scalar_select 0, %s8, %s6
  loop: start=0, step=1, limit=4
  $region2: #{twin_conv.1} parent=0 // loop_pre_header
    _
  $region3: #{twin_conv.1} parent=0 // loop_header
    %s11 = sphi 0, %s15
    %p12 = scmp.ge.s32.totalorder %s11, 4
    %s21 = sphi 0, %s23
    %s24 = sphi 0, %s21
    %s25 = sphi 0, %s24
    %s41 = sphi 0, %s25
    %s45 = sphi 0, %s45
    %s47 = sphi 0, %s45
    %s48 = sphi 0, %s47
    %s62 = sphi 0, %s48
    %s66 = sphi 0, %s66
    %s68 = sphi 0, %s66
    %s69 = sphi 0, %s68
    %s83 = sphi 0, %s69
    %s87 = sphi 0, %s87
    %s89 = sphi 0, %s87
    %s90 = sphi 0, %s89
    %s104 = sphi 0, %s90
    %s108 = sphi 0, %s108
    %s110 = sphi 0, %s108
    %s111 = sphi 0, %s110
    %s125 = sphi 0, %s111
    %s131 = sphi 0, %s133
    %s134 = sphi 0, %s131
    %s135 = sphi 0, %s134
    %s151 = sphi 0, %s135
  $region4: #{twin_conv.1} parent=0 // loop_header_branch
    %14 = sbr.rel (%p12) target = $region8
  $region5: #{twin_conv.1} parent=0 // loop_body
    %s16 = ssub.s32 %s11, 1
    %s17 = ssub.s32 %s11, 2
    %s18 = sadd.s32 %s11, 1
    %s19 = ssub.s32 %s11, %s18
    %p20 = scmp.eq.s32.totalorder %s19, 0
    %s22 = sadd.s32 %s21, 1
    %s23 = scalar_select %p20, %s21, %s22
    %p26 = pneg %p20
    %p27 = scmp.eq.s32.totalorder %s11, 1
    %p28 = por %p26, %p27
    %p29 = scmp.ne.s32.totalorder %s21, %s24
    %p30 = scmp.eq.s32.totalorder %s11, 0
    %p31 = por %p29, %p30
    %p32 = scmp.ne.s32.totalorder %s21, %s24
    %p33 = scmp.eq.s32.totalorder %s16, 1
    %p34 = por %p32, %p33
    %p35 = scmp.ne.s32.totalorder %s24, %s25
    %p36 = scmp.eq.s32.totalorder %s16, 0
    %p37 = por %p35, %p36
    %p38 = scmp.ne.s32.totalorder %s24, %s25
    %p39 = scmp.eq.s32.totalorder %s17, 1
    %p40 = por %p38, %p39
    %p42 = scmp.ne.s32.totalorder %s25, %s41
    %p43 = scmp.eq.s32.totalorder %s17, 0
    %p44 = por %p42, %p43
    %s46 = sadd.s32 %s45, 1
    %p49 = scmp.eq.s32.totalorder %s11, 1
    %p50 = scmp.ne.s32.totalorder %s45, %s47
    %p51 = scmp.eq.s32.totalorder %s11, 0
    %p52 = por %p50, %p51
    %p53 = scmp.ne.s32.totalorder %s45, %s47
    %p54 = scmp.eq.s32.totalorder %s16, 1
    %p55 = por %p53, %p54
    %p56 = scmp.ne.s32.totalorder %s47, %s48
    %p57 = scmp.eq.s32.totalorder %s16, 0
    %p58 = por %p56, %p57
    %p59 = scmp.ne.s32.totalorder %s47, %s48
    %p60 = scmp.eq.s32.totalorder %s17, 1
    %p61 = por %p59, %p60
    %p63 = scmp.ne.s32.totalorder %s48, %s62
    %p64 = scmp.eq.s32.totalorder %s17, 0
    %p65 = por %p63, %p64
    %s67 = sadd.s32 %s66, 1
    %p70 = scmp.eq.s32.totalorder %s11, 1
    %p71 = scmp.ne.s32.totalorder %s66, %s68
    %p72 = scmp.eq.s32.totalorder %s11, 0
    %p73 = por %p71, %p72
    %p74 = scmp.ne.s32.totalorder %s66, %s68
    %p75 = scmp.eq.s32.totalorder %s16, 1
    %p76 = por %p74, %p75
    %p77 = scmp.ne.s32.totalorder %s68, %s69
    %p78 = scmp.eq.s32.totalorder %s16, 0
    %p79 = por %p77, %p78
    %p80 = scmp.ne.s32.totalorder %s68, %s69
    %p81 = scmp.eq.s32.totalorder %s17, 1
    %p82 = por %p80, %p81
    %p84 = scmp.ne.s32.totalorder %s69, %s83
    %p85 = scmp.eq.s32.totalorder %s17, 0
    %p86 = por %p84, %p85
    %s88 = sadd.s32 %s87, 1
    %p91 = scmp.eq.s32.totalorder %s11, 1
    %p92 = scmp.ne.s32.totalorder %s87, %s89
    %p93 = scmp.eq.s32.totalorder %s11, 0
    %p94 = por %p92, %p93
    %p95 = scmp.ne.s32.totalorder %s87, %s89
    %p96 = scmp.eq.s32.totalorder %s16, 1
    %p97 = por %p95, %p96
    %p98 = scmp.ne.s32.totalorder %s89, %s90
    %p99 = scmp.eq.s32.totalorder %s16, 0
    %p100 = por %p98, %p99
    %p101 = scmp.ne.s32.totalorder %s89, %s90
    %p102 = scmp.eq.s32.totalorder %s17, 1
    %p103 = por %p101, %p102
    %p105 = scmp.ne.s32.totalorder %s90, %s104
    %p106 = scmp.eq.s32.totalorder %s17, 0
    %p107 = por %p105, %p106
    %s109 = sadd.s32 %s108, 1
    %p112 = scmp.eq.s32.totalorder %s11, 1
    %p113 = scmp.ne.s32.totalorder %s108, %s110
    %p114 = scmp.eq.s32.totalorder %s11, 0
    %p115 = por %p113, %p114
    %p116 = scmp.ne.s32.totalorder %s108, %s110
    %p117 = scmp.eq.s32.totalorder %s16, 1
    %p118 = por %p116, %p117
    %p119 = scmp.ne.s32.totalorder %s110, %s111
    %p120 = scmp.eq.s32.totalorder %s16, 0
    %p121 = por %p119, %p120
    %p122 = scmp.ne.s32.totalorder %s110, %s111
    %p123 = scmp.eq.s32.totalorder %s17, 1
    %p124 = por %p122, %p123
    %p126 = scmp.ne.s32.totalorder %s111, %s125
    %p127 = scmp.eq.s32.totalorder %s17, 0
    %p128 = por %p126, %p127
    %s129 = ssub.s32 %s11, %s18
    %p130 = scmp.eq.s32.totalorder %s129, 0
    %s132 = sadd.s32 %s131, 1
    %s133 = scalar_select %p130, %s131, %s132
    %p136 = pneg %p130
    %p137 = scmp.eq.s32.totalorder %s11, 1
    %p138 = por %p136, %p137
    %p139 = scmp.ne.s32.totalorder %s131, %s134
    %p140 = scmp.eq.s32.totalorder %s11, 0
    %p141 = por %p139, %p140
    %p142 = scmp.ne.s32.totalorder %s131, %s134
    %p143 = scmp.eq.s32.totalorder %s16, 1
    %p144 = por %p142, %p143
    %p145 = scmp.ne.s32.totalorder %s134, %s135
    %p146 = scmp.eq.s32.totalorder %s16, 0
    %p147 = por %p145, %p146
    %p148 = scmp.ne.s32.totalorder %s134, %s135
    %p149 = scmp.eq.s32.totalorder %s17, 1
    %p150 = por %p148, %p149
    %p152 = scmp.ne.s32.totalorder %s135, %s151
    %p153 = scmp.eq.s32.totalorder %s17, 0
    %p154 = por %p152, %p153
    %p155 = scmp.le.s32.totalorder 1, %s11
    %p156 = scmp.lt.s32.totalorder %s11, 3
    %p157 = pnand %p155, %p156
    %p158 = pneg %p157
    // Predicated region
    $region9: #{twin_conv.1} parent=5 // pred_check
      _
    $region10: #{twin_conv.1} parent=5 // pred_check_branch
      %160 = sbr.rel (%p157) target = $region12
    $region11: #{twin_conv.1} parent=5 // pred_region
      %s161 = ssub.s32 %s11, 1
      // Predicated region
      $region13: #{twin_conv.1} parent=11 // pred_check
        %p162 = pneg %p58
      $region14: #{twin_conv.1} parent=11 // pred_check_branch
        %164 = sbr.rel (%p162) target = $region16
      $region15: #{twin_conv.1} parent=11 // pred_region
        _
      $region16: #{twin_conv.1} parent=11 // pred_fallthru
        _
      // Predicated region
      $region17: #{twin_conv.1} parent=11 // pred_check
        %p165 = pneg %p79
      $region18: #{twin_conv.1} parent=11 // pred_check_branch
        %167 = sbr.rel (%p165) target = $region20
      $region19: #{twin_conv.1} parent=11 // pred_region
        _
      $region20: #{twin_conv.1} parent=11 // pred_fallthru
        _
      // Predicated region
      $region21: #{twin_conv.1} parent=11 // pred_check
        %p168 = pneg %p100
      $region22: #{twin_conv.1} parent=11 // pred_check_branch
        %170 = sbr.rel (%p168) target = $region24
      $region23: #{twin_conv.1} parent=11 // pred_region
        _
      $region24: #{twin_conv.1} parent=11 // pred_fallthru
        _
      // Predicated region
      $region25: #{twin_conv.1} parent=11 // pred_check
        %p171 = pneg %p121
      $region26: #{twin_conv.1} parent=11 // pred_check_branch
        %173 = sbr.rel (%p171) target = $region28
      $region27: #{twin_conv.1} parent=11 // pred_region
        _
      $region28: #{twin_conv.1} parent=11 // pred_fallthru
        _
    $region12: #{twin_conv.1} parent=5 // pred_fallthru
      _
    %p174 = scmp.lt.s32.totalorder %s11, 2
    // Predicated region
    $region29: #{twin_conv.1} parent=5 // pred_check
      %p175 = pneg %p174
    $region30: #{twin_conv.1} parent=5 // pred_check_branch
      %177 = sbr.rel (%p175) target = $region32
    $region31: #{twin_conv.1} parent=5 // pred_region
      // Predicated region
      $region33: #{twin_conv.1} parent=31 // pred_check
        %p178 = pneg %p31
      $region34: #{twin_conv.1} parent=31 // pred_check_branch
        %180 = sbr.rel (%p178) target = $region36
      $region35: #{twin_conv.1} parent=31 // pred_region
        %p181 = scmp.lt.s32.totalorder %s11, 1
        %s182 = scalar_select %p181, %s11, 1
        %s183 = smul.addr %s182, 3
        %s184 = smul.addr %s183, 4
        %s185 = scalar_lea.vmem %s0, %s184
      $region36: #{twin_conv.1} parent=31 // pred_fallthru
        _
    $region32: #{twin_conv.1} parent=5 // pred_fallthru
      _
    %p186 = scmp.le.s32.totalorder 1, %s11
    %p187 = scmp.lt.s32.totalorder %s11, 3
    %p188 = pnand %p186, %p187
    %p189 = pneg %p188
    // Predicated region
    $region37: #{twin_conv.1} parent=5 // pred_check
      _
    $region38: #{twin_conv.1} parent=5 // pred_check_branch
      %191 = sbr.rel (%p188) target = $region40
    $region39: #{twin_conv.1} parent=5 // pred_region
      %s192 = ssub.s32 %s11, 1
      %p193 = scmp.lt.s32.totalorder %s16, 1
      %s194 = scalar_select %p193, %s16, 1
      %s195 = smul.addr %s194, 3
      %s196 = smul.addr %s195, 4
      %s197 = scalar_lea.vmem %s0, %s196
      %p198 = pneg %p37
      %p199 = pneg %p34
      %p200 = pneg %p58
      %p201 = pneg %p55
      %p202 = pneg %p79
      %p203 = pneg %p76
      %p204 = pneg %p100
      %p205 = pneg %p97
      %p206 = pneg %p121
      %p207 = pneg %p118
      %p208 = pneg %p147
      %p209 = pneg %p144
      %p210 = scmp.lt.s32.totalorder %s16, 1
      %s211 = scalar_select %p210, %s16, 1
      %s212 = smul.addr %s211, 8
      %s213 = smul.addr %s212, 8
      %s214 = scalar_lea.vmem %s5, %s213
      %p215 = scmp.lt.s32.totalorder %s16, 1
      %s216 = scalar_select %p215, %s16, 1
      %s217 = smul.addr %s216, 3
      %s218 = smul.addr %s217, 4
      %s219 = scalar_lea.vmem %s0, %s218
      %p220 = scmp.lt.s32.totalorder %s16, 1
      %s221 = scalar_select %p220, %s16, 1
      %s222 = smul.addr %s221, 8
      %s223 = smul.addr %s222, 8
      %s224 = scalar_lea.vmem %s5, %s223
      %v225 = vld [vmem:[%s219] sm:$0xff]
      %v226 = vld [vmem:[%s219 + $0x8] sm:$0xf]
      %v227 = vld [vmem:[%s3] sm:$0x3]
      %v228 = vld [vmem:[%s4] sm:$0x3]
      %v230 = vlaneseq
      %v231 = vshrl.u32 %v230, 7
      %v232 = vsub.s32 0, %v231
      %v233 = vrot.slane %v227, %v232
      %v234 = vlaneseq
      %v235 = vshrl.u32 %v234, 7
      %v236 = vsub.s32 1, %v235
      %v237 = vrot.slane %v227, %v236
      %v238 = vcombine.low %v233, %v237
      %v240 = vmul.f32 %v225, %v238
      %v242 = vlaneseq
      %v243 = vshrl.u32 %v242, 7
      %v244 = vsub.s32 0, %v243
      %v245 = vrot.slane %v228, %v244
      %v246 = vlaneseq
      %v247 = vshrl.u32 %v246, 7
      %v248 = vsub.s32 1, %v247
      %v249 = vrot.slane %v228, %v248
      %v250 = vcombine.low %v245, %v249
      %251 = vrot.lane.b32.xlu0 %v250, 2
      %v252 = vpop.permute.xlu0 %251
      %v253 = vrot.slane %v252, 4
      %vm254 = vcmask 15360
      %v255 = vsel %vm254, %v253, %v252
      %v258 = vmul.f32 %v225, %v255
      %v259 = vmul.f32 %v226, %v253
      %260 = vrot.lane.b32.xlu0 %v238, 16
      %v261 = vpop.permute.xlu0 %260
      %v262 = vrot.slane %v261, 4
      %vm263 = vcmask 130048
      %v264 = vsel %vm263, %v262, %v261
      %v267 = vmul.f32 %v225, %v264
      %v268 = vmul.f32 %v226, %v262
      %269 = vrot.lane.b32.xlu0 %v250, 18
      %v270 = vpop.permute.xlu0 %269
      %v271 = vrot.slane %v270, 4
      %vm272 = vcmask 146432
      %v273 = vsel %vm272, %v271, %v270
      %v276 = vmul.f32 %v225, %v273
      %v277 = vmul.f32 %v226, %v271
      %278 = vrot.lane.b32.xlu0 %v238, 32
      %v279 = vpop.permute.xlu0 %278
      %v280 = vrot.slane %v279, 4
      %vm281 = vcmask 261120
      %v282 = vsel %vm281, %v280, %v279
      %v285 = vmul.f32 %v225, %v282
      %v286 = vmul.f32 %v226, %v280
      %287 = vrot.lane.b32.xlu0 %v250, 34
      %v288 = vpop.permute.xlu0 %287
      %v289 = vrot.slane %v288, 4
      %vm290 = vcmask 277504
      %v291 = vsel %vm290, %v289, %v288
      %v294 = vmul.f32 %v225, %v291
      %v295 = vmul.f32 %v226, %v289
      %v297 = vcombine.high %v240, %v240
      %v301 = vcombine.low %v225, %v225
      %v302 = vcombine.low %v226, %v226
      %303 = vrot.lane.b32.xlu0 %v301, 127
      %v304 = vpop.permute.xlu0 %303
      %305 = vrot.lane.b32.xlu0 %v225, 127
      %v306 = vpop.permute.xlu0 %305
      %307 = vrot.lane.b32.xlu0 %v302, 127
      %v308 = vpop.permute.xlu0 %307
      %vm309 = vcmask 1039360
      %v310 = vsel %vm309, %v304, %v306
      %v311 = vsel %vm309, %v306, %v308
      %v316 = vcombine.high %v258, %v258
      %317 = vrot.lane.b32.xlu0 %v258, 126
      %v318 = vpop.permute.xlu0 %317
      %319 = vrot.lane.b32.xlu0 %v316, 126
      %v320 = vpop.permute.xlu0 %319
      %321 = vrot.lane.b32.xlu0 %v259, 126
      %v322 = vpop.permute.xlu0 %321
      %vm323 = vcmask 1031168
      %v324 = vsel %vm323, %v318, %v320
      %v325 = vsel %vm323, %v320, %v322
      %v330 = vcombine.low %v267, %v267
      %v331 = vcombine.low %v268, %v268
      %332 = vrot.lane.b32.xlu0 %v330, 112
      %v333 = vpop.permute.xlu0 %332
      %334 = vrot.lane.b32.xlu0 %v267, 112
      %v335 = vpop.permute.xlu0 %334
      %336 = vrot.lane.b32.xlu0 %v331, 112
      %v337 = vpop.permute.xlu0 %336
      %vm338 = vcmask 916480
      %v339 = vsel %vm338, %v333, %v335
      %v340 = vsel %vm338, %v335, %v337
      %v343 = vcombine.high %v225, %v225
      %344 = vrot.lane.b32.xlu0 %v225, 111
      %v345 = vpop.permute.xlu0 %344
      %346 = vrot.lane.b32.xlu0 %v343, 111
      %v347 = vpop.permute.xlu0 %346
      %348 = vrot.lane.b32.xlu0 %v226, 111
      %v349 = vpop.permute.xlu0 %348
      %vm350 = vcmask 908288
      %v351 = vsel %vm350, %v345, %v347
      %v352 = vsel %vm350, %v347, %v349
      %v357 = vcombine.low %v276, %v276
      %v358 = vcombine.low %v277, %v277
      %359 = vrot.lane.b32.xlu0 %v357, 110
      %v360 = vpop.permute.xlu0 %359
      %361 = vrot.lane.b32.xlu0 %v276, 110
      %v362 = vpop.permute.xlu0 %361
      %363 = vrot.lane.b32.xlu0 %v358, 110
      %v364 = vpop.permute.xlu0 %363
      %vm365 = vcmask 900096
      %v366 = vsel %vm365, %v360, %v362
      %v367 = vsel %vm365, %v362, %v364
      %v372 = vcombine.high %v285, %v285
      %373 = vrot.lane.b32.xlu0 %v285, 96
      %v374 = vpop.permute.xlu0 %373
      %375 = vrot.lane.b32.xlu0 %v372, 96
      %v376 = vpop.permute.xlu0 %375
      %377 = vrot.lane.b32.xlu0 %v286, 96
      %v378 = vpop.permute.xlu0 %377
      %vm379 = vcmask 785408
      %v380 = vsel %vm379, %v374, %v376
      %v381 = vsel %vm379, %v376, %v378
      %384 = vrot.lane.b32.xlu0 %v301, 95
      %v385 = vpop.permute.xlu0 %384
      %386 = vrot.lane.b32.xlu0 %v225, 95
      %v387 = vpop.permute.xlu0 %386
      %388 = vrot.lane.b32.xlu0 %v302, 95
      %v389 = vpop.permute.xlu0 %388
      %vm390 = vcmask 777216
      %v391 = vsel %vm390, %v385, %v387
      %v392 = vsel %vm390, %v387, %v389
      %v397 = vcombine.high %v294, %v294
      %398 = vrot.lane.b32.xlu0 %v294, 94
      %v399 = vpop.permute.xlu0 %398
      %400 = vrot.lane.b32.xlu0 %v397, 94
      %v401 = vpop.permute.xlu0 %400
      %402 = vrot.lane.b32.xlu0 %v295, 94
      %v403 = vpop.permute.xlu0 %402
      %vm404 = vcmask 769024
      %v405 = vsel %vm404, %v399, %v401
      %v406 = vsel %vm404, %v401, %v403
      %vm407 = vcmask 1043456
      %v408 = vsel %vm407, %v240, %v310
      %v409 = vsel %vm407, %v297, %v311
      %v410 = vsel %vm407, %v324, %v339
      %v411 = vsel %vm407, %v325, %v340
      %v412 = vsel %vm407, %v351, %v366
      %v413 = vsel %vm407, %v352, %v367
      %v414 = vsel %vm407, %v380, %v391
      %v415 = vsel %vm407, %v381, %v392
      %v416 = vld [vmem:[%s1] sm:$0xff]
      %v417 = vld [vmem:[%s1 + $0x8] sm:$0xff]
      %v418 = vld [vmem:[%s1 + $0x10] sm:$0xff]
      %v419 = vld [vmem:[%s1 + $0x18] sm:$0xff]
      %v420 = vld [vmem:[%s2] sm:$0xff]
      %v421 = vld [vmem:[%s2 + $0x8] sm:$0xff]
      %v422 = vld [vmem:[%s2 + $0x10] sm:$0xff]
      %v423 = vld [vmem:[%s2 + $0x18] sm:$0xff]
      %425 = vset.pattern.permute.xlu0 0
      %426 = vperm.xlu0 %425, %v420
      %v427 = vpop.permute.xlu0 %426
      %430 = vset.pattern.permute.xlu0 0
      %431 = vperm.xlu0 %430, %v421
      %v432 = vpop.permute.xlu0 %431
      %435 = vset.pattern.permute.xlu0 0
      %436 = vperm.xlu0 %435, %v422
      %v437 = vpop.permute.xlu0 %436
      %440 = vset.pattern.permute.xlu0 0
      %441 = vperm.xlu0 %440, %v423
      %v442 = vpop.permute.xlu0 %441
      %vm444 = vcmask 293888
      %v446 = vsel %vm444, %v416, 0
      %v449 = vsel %vm444, %v417, 0
      %v452 = vsel %vm444, %v418, 0
      %v455 = vsel %vm444, %v419, 0
      %v457 = vsel %vm407, %v405, 0
      %v459 = vsel %vm407, %v406, 0
      %461 = vmatprep.subr.mxu0 0.0
      %462 = vmatpush1.msra.mxu0 0.0
      %463 = vmatprep.subr.mxu0 0.0
      %464 = vmatpush1.msra.mxu0 0.0
      %465 = vmatprep.subr.mxu0 0.0
      %466 = vmatpush1.msra.mxu0 0.0
      %467 = vmatprep.subr.mxu0 0.0
      %468 = vmatpush1.msra.mxu0 0.0
      %469 = vmatprep.subr.mxu0 0.0
      %470 = vmatpush1.msra.mxu0 0.0
      %471 = vmatprep.subr.mxu0 0.0
      %472 = vmatpush1.msra.mxu0 0.0
      %473 = vmatprep.subr.mxu0 0.0
      %474 = vmatpush1.msra.mxu0 0.0
      %475 = vmatprep.subr.mxu0 0.0
      %476 = vmatpush1.msra.mxu0 0.0
      %477 = vmatprep.subr.mxu0 0.0
      %478 = vmatpush1.msra.mxu0 0.0
      %479 = vmatprep.subr.mxu0 0.0
      %480 = vmatpush1.msra.mxu0 0.0
      %481 = vmatprep.subr.mxu0 0.0
      %482 = vmatpush1.msra.mxu0 0.0
      %483 = vmatprep.subr.mxu0 %v459
      %484 = vmatpush1.msra.mxu0 %v457
      %485 = vmatprep.subr.mxu0 %v415
      %486 = vmatpush1.msra.mxu0 %v414
      %487 = vmatprep.subr.mxu0 %v413
      %488 = vmatpush1.msra.mxu0 %v412
      %489 = vmatprep.subr.mxu0 %v411
      %490 = vmatpush1.msra.mxu0 %v410
      %491 = vmatprep.subr.mxu0 %v409
      %492 = vmatpush1.msra.mxu0 %v408
      %493 = vmatprep.subr.mxu0 0.0
      %494 = vmatpush2.msra.mxu0 0.0
      %495 = vmatprep.subr.mxu0 0.0
      %496 = vmatpush2.msra.mxu0 0.0
      %497 = vmatprep.subr.mxu0 0.0
      %498 = vmatpush2.msra.mxu0 0.0
      %499 = vmatprep.subr.mxu0 0.0
      %500 = vmatpush2.msra.mxu0 0.0
      %501 = vmatprep.subr.mxu0 0.0
      %502 = vmatpush2.msra.mxu0 0.0
      %503 = vmatprep.subr.mxu0 0.0
      %504 = vmatpush2.msra.mxu0 0.0
      %505 = vmatprep.subr.mxu0 0.0
      %506 = vmatpush2.msra.mxu0 0.0
      %507 = vmatprep.subr.mxu0 0.0
      %508 = vmatpush2.msra.mxu0 0.0
      %509 = vmatprep.subr.mxu0 0.0
      %510 = vmatpush2.msra.mxu0 0.0
      %511 = vmatprep.subr.mxu0 0.0
      %512 = vmatpush2.msra.mxu0 0.0
      %513 = vmatprep.subr.mxu0 0.0
      %514 = vmatpush2.msra.mxu0 0.0
      %515 = vmatprep.subr.mxu0 0.0
      %516 = vmatpush2.msra.mxu0 0.0
      %517 = vmatprep.subr.mxu0 0.0
      %518 = vmatpush2.msra.mxu0 0.0
      %519 = vmatprep.subr.mxu0 0.0
      %520 = vmatpush2.msra.mxu0 0.0
      %521 = vmatprep.subr.mxu0 0.0
      %522 = vmatpush2.msra.mxu0 0.0
      %523 = vmatprep.subr.mxu0 0.0
      %524 = vmatpush2.msra.mxu0 0.0
      %525 = vmatprep.mubr.f32.mxu0 0.0
      %526 = vmatmul.mubr.f32.gmra.mxu0 %v446
      %v527 = vpop.f32.mrf.mxu0
      %v528 = vadd.f32 %v427, %v527
      %v529 = vpop.f32.mrf.mxu0
      %v530 = vadd.f32 %v427, %v529
      %531 = vmatprep.mubr.f32.mxu0 0.0
      %532 = vmatmul.mubr.f32.gmra.mxu0 %v449
      %v533 = vpop.f32.mrf.mxu0
      %v534 = vadd.f32 %v432, %v533
      %v535 = vpop.f32.mrf.mxu0
      %v536 = vadd.f32 %v432, %v535
      %537 = vmatprep.mubr.f32.mxu0 0.0
      %538 = vmatmul.mubr.f32.gmra.mxu0 %v452
      %v539 = vpop.f32.mrf.mxu0
      %v540 = vadd.f32 %v437, %v539
      %v541 = vpop.f32.mrf.mxu0
      %v542 = vadd.f32 %v437, %v541
      %543 = vmatprep.mubr.f32.mxu0 0.0
      %544 = vmatmul.mubr.f32.gmra.mxu0 %v455
      %v545 = vpop.f32.mrf.mxu0
      %v546 = vadd.f32 %v442, %v545
      %v547 = vpop.f32.mrf.mxu0
      %v548 = vadd.f32 %v442, %v547
      %549 = vdwg.mxu0
      %550 = vst [vmem:[%s224] sm:$0xff] %v528
      %551 = vst [vmem:[%s224 + $0x8] sm:$0xff] %v530
      %552 = vst [vmem:[%s224 + $0x10] sm:$0xff] %v534
      %553 = vst [vmem:[%s224 + $0x18] sm:$0xff] %v536
      %554 = vst [vmem:[%s224 + $0x20] sm:$0xff] %v540
      %555 = vst [vmem:[%s224 + $0x28] sm:$0xff] %v542
      %556 = vst [vmem:[%s224 + $0x30] sm:$0xff] %v546
      %557 = vst [vmem:[%s224 + $0x38] sm:$0xff] %v548
      %p558 = scmp.lt.s32.totalorder %s16, 1
      %s559 = scalar_select %p558, %s16, 1
      %s560 = smul.addr %s559, 8
      %s561 = smul.addr %s560, 8
      %s562 = scalar_lea.vmem %s5, %s561
      // Predicated region
      $region41: #{twin_conv.1} parent=39 // pred_check
        %p563 = pneg %p144
      $region42: #{twin_conv.1} parent=39 // pred_check_branch
        %565 = sbr.rel (%p563) target = $region44
      $region43: #{twin_conv.1} parent=39 // pred_region
        _
      $region44: #{twin_conv.1} parent=39 // pred_fallthru
        _
    $region40: #{twin_conv.1} parent=5 // pred_fallthru
      _
    %p566 = scmp.le.s32.totalorder 2, %s11
    // Predicated region
    $region45: #{twin_conv.1} parent=5 // pred_check
      %p567 = pneg %p566
    $region46: #{twin_conv.1} parent=5 // pred_check_branch
      %569 = sbr.rel (%p567) target = $region48
    $region47: #{twin_conv.1} parent=5 // pred_region
      %s570 = ssub.s32 %s11, 2
      // Predicated region
      $region49: #{twin_conv.1} parent=47 // pred_check
        %p571 = pneg %p150
      $region50: #{twin_conv.1} parent=47 // pred_check_branch
        %573 = sbr.rel (%p571) target = $region52
      $region51: #{twin_conv.1} parent=47 // pred_region
        %p574 = scmp.lt.s32.totalorder %s17, 1
        %s575 = scalar_select %p574, %s17, 1
        %s576 = smul.addr %s575, 8
        %s577 = smul.addr %s576, 8
        %s578 = scalar_lea.vmem %s5, %s577
      $region52: #{twin_conv.1} parent=47 // pred_fallthru
        _
    $region48: #{twin_conv.1} parent=5 // pred_fallthru
      _
  $region6: #{twin_conv.1} parent=0 // loop_footer
    %s15 = sadd.s32 1, %s11
  $region7: #{twin_conv.1} parent=0 // loop_footer_branch
    %10 = sbr.rel target = $region3
  $region8: #{twin_conv.1} parent=0 // loop_exit
    _

</llo_original>
